<compile_context>
chip_gen: v6e
topology: v6e:2x2x1
jax: 0.10.0
libtpu: 0.0.40
codegen_flags: <defaults>
</compile_context>

<pallas_src>
import functools

import jax
import jax.numpy as jnp
from jax.experimental import pallas as pl
from jax.experimental.pallas import tpu as pltpu


def _simloss_kernel(alpha_ref, label_ref, out1_ref, act1_ref, out2_ref,
                    act2_ref, loss_ref, cos_acc, nll_acc, *, batch, tile_b):
    pid = pl.program_id(0)
    nsteps = pl.num_programs(0)

    # ---- init accumulators on first tile ----
    @pl.when(pid == 0)
    def _():
        cos_acc[...] = jnp.zeros_like(cos_acc)
        nll_acc[...] = jnp.zeros_like(nll_acc)

    # ---- cosine similarity term (rowwise over feature axis) ----
    a1 = act1_ref[...].astype(jnp.float32)
    a2 = act2_ref[...].astype(jnp.float32)
    dot = jnp.sum(a1 * a2, axis=1, keepdims=True)            # (tile_b, 1)
    s1 = jnp.sum(a1 * a1, axis=1, keepdims=True)
    s2 = jnp.sum(a2 * a2, axis=1, keepdims=True)
    # dot / max(sqrt(s1)*sqrt(s2), 1e-8) == dot * rsqrt(max(s1*s2, 1e-16))
    cos = dot * jax.lax.rsqrt(jnp.maximum(s1 * s2, 1e-16))

    # ---- cross-entropy partial sums over logits ----
    labels = label_ref[...]                                   # (tile_b, 1) int32
    l1 = out1_ref[...].astype(jnp.float32)                    # (tile_b, C)
    l2 = out2_ref[...].astype(jnp.float32)

    # one-hot built once, reused for both logit tensors
    col = jax.lax.broadcasted_iota(jnp.int32, l1.shape, 1)
    onehot = (col == labels).astype(jnp.float32)

    def nll(z):
        m = jnp.max(z, axis=1, keepdims=True)
        zs = z - m
        lse = jnp.log(jnp.sum(jnp.exp(zs), axis=1, keepdims=True))
        picked = jnp.sum(onehot * zs, axis=1, keepdims=True)
        return lse - picked                                   # (tile_b, 1)

    nll_both = nll(l1) + nll(l2)

    # ---- mask padded remainder rows (only traced if B % tile_b != 0) ----
    if batch % tile_b != 0:
        rows = pid * tile_b + jax.lax.broadcasted_iota(
            jnp.int32, (tile_b, 1), 0)
        valid = rows < batch
        cos = jnp.where(valid, cos, 0.0)
        nll_both = jnp.where(valid, nll_both, 0.0)

    cos_acc[...] += jnp.sum(cos, keepdims=True)
    nll_acc[...] += jnp.sum(nll_both, keepdims=True)

    # ---- finalize on last tile ----
    @pl.when(pid == nsteps - 1)
    def _():
        alpha = alpha_ref[0, 0]
        inv_b = 1.0 / batch
        cos_loss = 1.0 - cos_acc[...] * inv_b
        ce = nll_acc[...] * inv_b
        loss_ref[...] = alpha * cos_loss + (1.0 - alpha) * ce


def sim_loss(output1, act1, output2, act2, label, alpha, *, tile_b=None):
    """Pallas implementation of SimLoss.forward. Returns a scalar f32."""
    B, C = output1.shape
    D = act1.shape[1]

    alpha_arr = jnp.asarray(alpha, jnp.float32).reshape(1, 1)
    label_2d = label.astype(jnp.int32).reshape(B, 1)

    # --- choose a batch tile that keeps double-buffered inputs small enough
    # for the default scoped-VMEM limit on v5e / v6e / v7x ---
    itemsize = max(output1.dtype.itemsize, act1.dtype.itemsize)
    bytes_per_row = 2 * (C + D) * itemsize + 4               # logits+acts+label
    if tile_b is None:
        budget = 12 * 1024 * 1024                            # ~12 MiB of tiles
        tile_b = int(max(8, min(512, (budget // (2 * bytes_per_row)) // 8 * 8)))
    if B <= tile_b:
        tile_b = B                                           # single full tile
    num_tiles = pl.cdiv(B, tile_b)

    cost = pl.CostEstimate(
        flops=6 * B * D + 8 * B * C,
        bytes_accessed=2 * B * (C + D) * itemsize + B * 4 + 8,
        transcendentals=2 * B * C + B,
    )

    kernel = functools.partial(_simloss_kernel, batch=B, tile_b=tile_b)

    out = pl.pallas_call(
        kernel,
        out_shape=jax.ShapeDtypeStruct((1, 1), jnp.float32),
        grid=(num_tiles,),
        in_specs=[
            pl.BlockSpec(memory_space=pltpu.MemorySpace.SMEM),    # alpha
            pl.BlockSpec((tile_b, 1), lambda i: (i, 0)),          # label
            pl.BlockSpec((tile_b, C), lambda i: (i, 0)),          # output1
            pl.BlockSpec((tile_b, D), lambda i: (i, 0)),          # act1
            pl.BlockSpec((tile_b, C), lambda i: (i, 0)),          # output2
            pl.BlockSpec((tile_b, D), lambda i: (i, 0)),          # act2
        ],
        out_specs=pl.BlockSpec((1, 1), lambda i: (0, 0)),
        scratch_shapes=[
            pltpu.VMEM((1, 1), jnp.float32),   # sum cos
            pltpu.VMEM((1, 1), jnp.float32),   # sum (nll1 + nll2)
        ],
        compiler_params=pltpu.CompilerParams(
            dimension_semantics=("arbitrary",)),
        cost_estimate=cost,
    )(alpha_arr, label_2d, output1, act1, output2, act2)
    return out[0, 0]


def sim_loss_ref(output1, act1, output2, act2, label, alpha):
    """Pure-JAX reference for verification."""
    dot = jnp.sum(act1 * act2, axis=1)
    n1 = jnp.linalg.norm(act1, axis=1)
    n2 = jnp.linalg.norm(act2, axis=1)
    cos = dot / jnp.maximum(n1 * n2, 1e-8)
    cos_loss = 1.0 - jnp.mean(cos)

    def ce(logits, lab):
        logp = jax.nn.log_softmax(logits, axis=1)
        return -jnp.mean(jnp.take_along_axis(logp, lab[:, None], axis=1))

    return alpha * cos_loss + (1 - alpha) * (ce(output1, label) + ce(output2, label))


if __name__ == "__main__":
    key = jax.random.PRNGKey(0)

    # --- small test (single tile) ---
    k1, k2, k3, k4, k5 = jax.random.split(key, 5)
    B, C, D = 8, 16, 32
    output1 = jax.random.normal(k1, (B, C), jnp.float32)
    output2 = jax.random.normal(k2, (B, C), jnp.float32)
    act1 = jax.random.normal(k3, (B, D), jnp.float32)
    act2 = jax.random.normal(k4, (B, D), jnp.float32)
    label = jax.random.randint(k5, (B,), 0, C, jnp.int32)
    alpha = 0.3

    loss = sim_loss(output1, act1, output2, act2, label, alpha)
    jax.block_until_ready(loss)
    ref = sim_loss_ref(output1, act1, output2, act2, label, alpha)
    assert jnp.allclose(loss, ref, rtol=1e-5, atol=1e-5), (loss, ref)

    # --- tiled test (grid > 1 + masked remainder rows), still small shapes ---
    k6, k7, k8, k9, k10 = jax.random.split(jax.random.PRNGKey(1), 5)
    B2 = 144   # with tile_b=64 -> 2 full tiles + 16-row remainder (masked)
    output1b = jax.random.normal(k6, (B2, C), jnp.float32)
    output2b = jax.random.normal(k7, (B2, C), jnp.float32)
    act1b = jax.random.normal(k8, (B2, D), jnp.float32)
    act2b = jax.random.normal(k9, (B2, D), jnp.float32)
    labelb = jax.random.randint(k10, (B2,), 0, C, jnp.int32)

    loss2 = sim_loss(output1b, act1b, output2b, act2b, labelb, alpha, tile_b=64)
    jax.block_until_ready(loss2)
    ref2 = sim_loss_ref(output1b, act1b, output2b, act2b, labelb, alpha)
    assert jnp.allclose(loss2, ref2, rtol=1e-5, atol=1e-5), (loss2, ref2)

    print("KERNEL_OK")
</pallas_src>

<mosaic_0001>
module attributes {stable_mosaic.version = 11 : i64} {
  func.func @_simloss_kernel(%arg0: i32, %arg1: memref<1x1xf32, #tpu.memory_space<smem>>, %arg2: memref<8x1xi32, #tpu.memory_space<vmem>>, %arg3: memref<8x16xf32, #tpu.memory_space<vmem>>, %arg4: memref<8x32xf32, #tpu.memory_space<vmem>>, %arg5: memref<8x16xf32, #tpu.memory_space<vmem>>, %arg6: memref<8x32xf32, #tpu.memory_space<vmem>>, %arg7: memref<1x1xf32, #tpu.memory_space<vmem>>, %arg8: memref<1x1xf32, #tpu.memory_space<vmem>>, %arg9: memref<1x1xf32, #tpu.memory_space<vmem>>) attributes {dimension_semantics = [#tpu.dimension_semantics<arbitrary>], iteration_bounds = array<i64: 1>, scalar_prefetch = 0 : i64, scratch_operands = 2 : i64, tpu.core_type = #tpu.core_type<tc>, window_params = [{transform_indices = @transform_0, window_bounds = array<i64: 1, 1>}, {transform_indices = @transform_1, window_bounds = array<i64: 8, 1>}, {transform_indices = @transform_2, window_bounds = array<i64: 8, 16>}, {transform_indices = @transform_3, window_bounds = array<i64: 8, 32>}, {transform_indices = @transform_4, window_bounds = array<i64: 8, 16>}, {transform_indices = @transform_5, window_bounds = array<i64: 8, 32>}, {pipeline_mode = #tpu.pipeline_mode<synchronous>, transform_indices = @transform_6, window_bounds = array<i64: 1, 1>}]} {
    %c0_i32 = arith.constant 0 : i32
    %0 = arith.cmpi eq, %arg0, %c0_i32 : i32
    %1 = arith.extui %0 : i1 to i32
    %c0_i32_0 = arith.constant 0 : i32
    %2 = arith.cmpi ne, %1, %c0_i32_0 : i32
    scf.if %2 {
      %cst_31 = arith.constant 0.000000e+00 : f32
      %71 = vector.broadcast %cst_31 : f32 to vector<1x1xf32>
      %c0_32 = arith.constant 0 : index
      %c0_33 = arith.constant 0 : index
      %72 = vector.load %arg8[%c0_32, %c0_33] : memref<1x1xf32, #tpu.memory_space<vmem>>, vector<1x1xf32>
      tpu.vector_store %arg8[%c0_32, %c0_33], %71 {strides = array<i32>} : memref<1x1xf32, #tpu.memory_space<vmem>>, vector<1x1xf32>,
      %cst_34 = arith.constant 0.000000e+00 : f32
      %73 = vector.broadcast %cst_34 : f32 to vector<1x1xf32>
      %c0_35 = arith.constant 0 : index
      %c0_36 = arith.constant 0 : index
      %74 = vector.load %arg9[%c0_35, %c0_36] : memref<1x1xf32, #tpu.memory_space<vmem>>, vector<1x1xf32>
      tpu.vector_store %arg9[%c0_35, %c0_36], %73 {strides = array<i32>} : memref<1x1xf32, #tpu.memory_space<vmem>>, vector<1x1xf32>,
    } else {
    }
    %c0 = arith.constant 0 : index
    %c0_1 = arith.constant 0 : index
    %3 = vector.load %arg4[%c0, %c0_1] : memref<8x32xf32, #tpu.memory_space<vmem>>, vector<8x32xf32>
    %c0_2 = arith.constant 0 : index
    %c0_3 = arith.constant 0 : index
    %4 = vector.load %arg6[%c0_2, %c0_3] : memref<8x32xf32, #tpu.memory_space<vmem>>, vector<8x32xf32>
    %5 = arith.mulf %3, %4 : vector<8x32xf32>
    %cst = arith.constant dense<0.000000e+00> : vector<8xf32>
    %6 = vector.multi_reduction <add>, %5, %cst [1] : vector<8x32xf32> to vector<8xf32>
    %7 = vector.shape_cast %6 : vector<8xf32> to vector<8x1xf32>
    %8 = arith.mulf %3, %3 : vector<8x32xf32>
    %cst_4 = arith.constant dense<0.000000e+00> : vector<8xf32>
    %9 = vector.multi_reduction <add>, %8, %cst_4 [1] : vector<8x32xf32> to vector<8xf32>
    %10 = vector.shape_cast %9 : vector<8xf32> to vector<8x1xf32>
    %11 = arith.mulf %4, %4 : vector<8x32xf32>
    %cst_5 = arith.constant dense<0.000000e+00> : vector<8xf32>
    %12 = vector.multi_reduction <add>, %11, %cst_5 [1] : vector<8x32xf32> to vector<8xf32>
    %13 = vector.shape_cast %12 : vector<8xf32> to vector<8x1xf32>
    %14 = arith.mulf %10, %13 : vector<8x1xf32>
    %cst_6 = arith.constant 1.000000e-16 : f32
    %15 = vector.broadcast %cst_6 : f32 to vector<8x1xf32>
    %16 = arith.maximumf %14, %15 : vector<8x1xf32>
    %17 = math.rsqrt %16 : vector<8x1xf32>
    %18 = arith.mulf %7, %17 : vector<8x1xf32>
    %c0_7 = arith.constant 0 : index
    %c0_8 = arith.constant 0 : index
    %19 = vector.load %arg2[%c0_7, %c0_8] : memref<8x1xi32, #tpu.memory_space<vmem>>, vector<8x1xi32>
    %c0_9 = arith.constant 0 : index
    %c0_10 = arith.constant 0 : index
    %20 = vector.load %arg3[%c0_9, %c0_10] : memref<8x16xf32, #tpu.memory_space<vmem>>, vector<8x16xf32>
    %c0_11 = arith.constant 0 : index
    %c0_12 = arith.constant 0 : index
    %21 = vector.load %arg5[%c0_11, %c0_12] : memref<8x16xf32, #tpu.memory_space<vmem>>, vector<8x16xf32>
    %22 = tpu.iota {dimensions = array<i32: 1>} : vector<8x16xi32>
    %23 = vector.broadcast %19 : vector<8x1xi32> to vector<8x16xi32>
    %24 = arith.cmpi eq, %22, %23 : vector<8x16xi32>
    %25 = arith.extui %24 : vector<8x16xi1> to vector<8x16xi32>
    %26 = arith.sitofp %25 : vector<8x16xi32> to vector<8x16xf32>
    %cst_13 = arith.constant dense<0xFF800000> : vector<8xf32>
    %27 = vector.multi_reduction <maximumf>, %20, %cst_13 [1] : vector<8x16xf32> to vector<8xf32>
    %28 = vector.shape_cast %27 : vector<8xf32> to vector<8x1xf32>
    %29 = vector.broadcast %28 : vector<8x1xf32> to vector<8x16xf32>
    %30 = arith.subf %20, %29 : vector<8x16xf32>
    %31 = math.exp %30 : vector<8x16xf32>
    %cst_14 = arith.constant dense<0.000000e+00> : vector<8xf32>
    %32 = vector.multi_reduction <add>, %31, %cst_14 [1] : vector<8x16xf32> to vector<8xf32>
    %33 = vector.shape_cast %32 : vector<8xf32> to vector<8x1xf32>
    %34 = math.log %33 : vector<8x1xf32>
    %35 = arith.mulf %26, %30 : vector<8x16xf32>
    %cst_15 = arith.constant dense<0.000000e+00> : vector<8xf32>
    %36 = vector.multi_reduction <add>, %35, %cst_15 [1] : vector<8x16xf32> to vector<8xf32>
    %37 = vector.shape_cast %36 : vector<8xf32> to vector<8x1xf32>
    %38 = arith.subf %34, %37 : vector<8x1xf32>
    %cst_16 = arith.constant dense<0xFF800000> : vector<8xf32>
    %39 = vector.multi_reduction <maximumf>, %21, %cst_16 [1] : vector<8x16xf32> to vector<8xf32>
    %40 = vector.shape_cast %39 : vector<8xf32> to vector<8x1xf32>
    %41 = vector.broadcast %40 : vector<8x1xf32> to vector<8x16xf32>
    %42 = arith.subf %21, %41 : vector<8x16xf32>
    %43 = math.exp %42 : vector<8x16xf32>
    %cst_17 = arith.constant dense<0.000000e+00> : vector<8xf32>
    %44 = vector.multi_reduction <add>, %43, %cst_17 [1] : vector<8x16xf32> to vector<8xf32>
    %45 = vector.shape_cast %44 : vector<8xf32> to vector<8x1xf32>
    %46 = math.log %45 : vector<8x1xf32>
    %47 = arith.mulf %26, %42 : vector<8x16xf32>
    %cst_18 = arith.constant dense<0.000000e+00> : vector<8xf32>
    %48 = vector.multi_reduction <add>, %47, %cst_18 [1] : vector<8x16xf32> to vector<8xf32>
    %49 = vector.shape_cast %48 : vector<8xf32> to vector<8x1xf32>
    %50 = arith.subf %46, %49 : vector<8x1xf32>
    %51 = arith.addf %38, %50 : vector<8x1xf32>
    %c0_19 = arith.constant 0 : index
    %c0_20 = arith.constant 0 : index
    %52 = vector.load %arg8[%c0_19, %c0_20] : memref<1x1xf32, #tpu.memory_space<vmem>>, vector<1x1xf32>
    %53 = vector.shape_cast %18 : vector<8x1xf32> to vector<1x8x1xf32>
    %cst_21 = arith.constant dense<0.000000e+00> : vector<1xf32>
    %54 = vector.multi_reduction <add>, %53, %cst_21 [1, 2] : vector<1x8x1xf32> to vector<1xf32>
    %55 = vector.shape_cast %54 : vector<1xf32> to vector<1x1x1xf32>
    %56 = vector.extract %55[0, 0, 0] : f32 from vector<1x1x1xf32>
    %57 = vector.broadcast %56 : f32 to vector<1x1xf32>
    %58 = arith.addf %52, %57 : vector<1x1xf32>
    %c0_22 = arith.constant 0 : index
    %c0_23 = arith.constant 0 : index
    %59 = vector.load %arg8[%c0_22, %c0_23] : memref<1x1xf32, #tpu.memory_space<vmem>>, vector<1x1xf32>
    tpu.vector_store %arg8[%c0_22, %c0_23], %58 {strides = array<i32>} : memref<1x1xf32, #tpu.memory_space<vmem>>, vector<1x1xf32>,
    %c0_24 = arith.constant 0 : index
    %c0_25 = arith.constant 0 : index
    %60 = vector.load %arg9[%c0_24, %c0_25] : memref<1x1xf32, #tpu.memory_space<vmem>>, vector<1x1xf32>
    %61 = vector.shape_cast %51 : vector<8x1xf32> to vector<1x8x1xf32>
    %cst_26 = arith.constant dense<0.000000e+00> : vector<1xf32>
    %62 = vector.multi_reduction <add>, %61, %cst_26 [1, 2] : vector<1x8x1xf32> to vector<1xf32>
    %63 = vector.shape_cast %62 : vector<1xf32> to vector<1x1x1xf32>
    %64 = vector.extract %63[0, 0, 0] : f32 from vector<1x1x1xf32>
    %65 = vector.broadcast %64 : f32 to vector<1x1xf32>
    %66 = arith.addf %60, %65 : vector<1x1xf32>
    %c0_27 = arith.constant 0 : index
    %c0_28 = arith.constant 0 : index
    %67 = vector.load %arg9[%c0_27, %c0_28] : memref<1x1xf32, #tpu.memory_space<vmem>>, vector<1x1xf32>
    tpu.vector_store %arg9[%c0_27, %c0_28], %66 {strides = array<i32>} : memref<1x1xf32, #tpu.memory_space<vmem>>, vector<1x1xf32>,
    %c0_i32_29 = arith.constant 0 : i32
    %68 = arith.cmpi eq, %arg0, %c0_i32_29 : i32
    %69 = arith.extui %68 : i1 to i32
    %c0_i32_30 = arith.constant 0 : i32
    %70 = arith.cmpi ne, %69, %c0_i32_30 : i32
    scf.if %70 {
      %c0_31 = arith.constant 0 : index
      %c0_32 = arith.constant 0 : index
      %71 = memref.load %arg1[%c0_31, %c0_32] : memref<1x1xf32, #tpu.memory_space<smem>>
      %c0_33 = arith.constant 0 : index
      %c0_34 = arith.constant 0 : index
      %72 = vector.load %arg8[%c0_33, %c0_34] : memref<1x1xf32, #tpu.memory_space<vmem>>, vector<1x1xf32>
      %cst_35 = arith.constant 1.250000e-01 : f32
      %73 = vector.broadcast %cst_35 : f32 to vector<1x1xf32>
      %74 = arith.mulf %72, %73 : vector<1x1xf32>
      %cst_36 = arith.constant 1.000000e+00 : f32
      %75 = vector.broadcast %cst_36 : f32 to vector<1x1xf32>
      %76 = arith.subf %75, %74 : vector<1x1xf32>
      %c0_37 = arith.constant 0 : index
      %c0_38 = arith.constant 0 : index
      %77 = vector.load %arg9[%c0_37, %c0_38] : memref<1x1xf32, #tpu.memory_space<vmem>>, vector<1x1xf32>
      %cst_39 = arith.constant 1.250000e-01 : f32
      %78 = vector.broadcast %cst_39 : f32 to vector<1x1xf32>
      %79 = arith.mulf %77, %78 : vector<1x1xf32>
      %80 = vector.broadcast %71 : f32 to vector<1x1xf32>
      %81 = arith.mulf %80, %76 : vector<1x1xf32>
      %cst_40 = arith.constant 1.000000e+00 : f32
      %82 = arith.subf %cst_40, %71 : f32
      %83 = vector.broadcast %82 : f32 to vector<1x1xf32>
      %84 = arith.mulf %83, %79 : vector<1x1xf32>
      %85 = arith.addf %81, %84 : vector<1x1xf32>
      %c0_41 = arith.constant 0 : index
      %c0_42 = arith.constant 0 : index
      %86 = vector.load %arg7[%c0_41, %c0_42] : memref<1x1xf32, #tpu.memory_space<vmem>>, vector<1x1xf32>
      tpu.vector_store %arg7[%c0_41, %c0_42], %85 {strides = array<i32>} : memref<1x1xf32, #tpu.memory_space<vmem>>, vector<1x1xf32>,
    } else {
    }
    return
  }
  func.func @transform_0(%arg0: i32) -> (i32, i32) {
    %c0_i32 = arith.constant 0 : i32
    %c0_i32_0 = arith.constant 0 : i32
    %c0_i32_1 = arith.constant 0 : i32
    return %c0_i32, %c0_i32_0 : i32, i32
  }
  func.func @transform_1(%arg0: i32) -> (i32, i32) {
    %c0_i32 = arith.constant 0 : i32
    %c0_i32_0 = arith.constant 0 : i32
    return %arg0, %c0_i32 : i32, i32
  }
  func.func @transform_2(%arg0: i32) -> (i32, i32) {
    %c0_i32 = arith.constant 0 : i32
    %c0_i32_0 = arith.constant 0 : i32
    return %arg0, %c0_i32 : i32, i32
  }
  func.func @transform_3(%arg0: i32) -> (i32, i32) {
    %c0_i32 = arith.constant 0 : i32
    %c0_i32_0 = arith.constant 0 : i32
    return %arg0, %c0_i32 : i32, i32
  }
  func.func @transform_4(%arg0: i32) -> (i32, i32) {
    %c0_i32 = arith.constant 0 : i32
    %c0_i32_0 = arith.constant 0 : i32
    return %arg0, %c0_i32 : i32, i32
  }
  func.func @transform_5(%arg0: i32) -> (i32, i32) {
    %c0_i32 = arith.constant 0 : i32
    %c0_i32_0 = arith.constant 0 : i32
    return %arg0, %c0_i32 : i32, i32
  }
  func.func @transform_6(%arg0: i32) -> (i32, i32) {
    %c0_i32 = arith.constant 0 : i32
    %c0_i32_0 = arith.constant 0 : i32
    %c0_i32_1 = arith.constant 0 : i32
    return %c0_i32, %c0_i32_0 : i32, i32
  }
}

</mosaic_0001>

<llo_original>
// kernel: tpu_custom_call.1
$region0: #{tpu_custom_call.1}
  #allocation0 [shape = 'u32[]', space=smem, size = 0x4, offset = 0x4, fixed_abs, tag = 'smem constant byte address 0x4 - core index']
  #allocation1 [shape = 'u32[144,128]{1,0:T(1,128)}', space=vmem, size = 0x12000, scoped, tag = 'internal scratch']
  #allocation2 [shape = 'f32[1,1]{1,0:T(1,128)}', space=vmem, size = 0x200, scoped, tag = 'scratch operand']
  #allocation3 [shape = 'f32[1,1]{1,0:T(1,128)}', space=vmem, size = 0x200, scoped, tag = 'scratch operand']
  #allocation4 [shape = 'f32[1,1]{1,0:T(1,128)S(6)}', space=smem, size = 0x200, scoped, tag = 'scoped memory for tpu_custom_call.1']
  %s0 = inlined_call_operand.<no memory space> [shape: f32[1,1], index: 0, kind: input, shape index: {}]
  %s1 = inlined_call_operand.vmem [shape: s32[8,1], index: 1, kind: input, shape index: {}]
  %s2 = inlined_call_operand.vmem [shape: f32[8,16], index: 2, kind: input, shape index: {}]
  %s3 = inlined_call_operand.hbm [shape: f32[8,32], index: 3, kind: input, shape index: {}]
  %s4 = inlined_call_operand.vmem [shape: f32[8,16], index: 4, kind: input, shape index: {}]
  %s5 = inlined_call_operand.hbm [shape: f32[8,32], index: 5, kind: input, shape index: {}]
  %s6 = inlined_call_operand.hbm [shape: f32[1,1], index: 6, kind: output, shape index: {}]
  %s7 = sld [smem:[#allocation0]]
  $region50: #{tpu_custom_call.1} parent=0
    _
  %s9 = ssub.s32 1, %s7
  %s10 = scalar_select 0, %s9, %s7
  %11 = sst [smem:[#allocation4]] %s0
  $region1: #{tpu_custom_call.1} parent=0
    #allocation5 [shape = 'u8[4096]{0}', space=vmem, size = 0x1000, scoped, tag = 'input window, operand 3, single buffered']
    #allocation6 [shape = 's32[1]{0}', space=sflag, size = 0x4, scoped, tag = 'scoped memory for tpu_custom_call.1']
    #allocation7 [shape = 's32[1]{0}', space=sflag, size = 0x4, scoped, tag = 'scoped memory for tpu_custom_call.1']
    #allocation8 [shape = 'u8[4096]{0}', space=vmem, size = 0x1000, scoped, tag = 'input window, operand 5, single buffered']
    #allocation9 [shape = 's32[1]{0}', space=sflag, size = 0x4, scoped, tag = 'scoped memory for tpu_custom_call.1']
    #allocation10 [shape = 'u8[512]{0}', space=vmem, size = 0x400, scoped, tag = 'output window, operand 0, single buffered']
    %12 = vsyncpa [#allocation6], 0
    %13 = vsyncpa [#allocation9], 0
    %14 = vsyncpa [#allocation7], 0
    // Predicated region
    $region2: #{tpu_custom_call.1} parent=1 // pred_check
      _
    $region3: #{tpu_custom_call.1} parent=1 // pred_check_branch
      %16 = sbr.rel (0) target = $region5
    $region4: #{tpu_custom_call.1} parent=1 // pred_region
      _
    $region5: #{tpu_custom_call.1} parent=1 // pred_fallthru
      _
    // Predicated region
    $region6: #{tpu_custom_call.1} parent=1 // pred_check
      _
    $region7: #{tpu_custom_call.1} parent=1 // pred_check_branch
      %18 = sbr.rel (0) target = $region9
    $region8: #{tpu_custom_call.1} parent=1 // pred_region
      _
    $region9: #{tpu_custom_call.1} parent=1 // pred_fallthru
      _
    // Predicated region
    $region10: #{tpu_custom_call.1} parent=1 // pred_check
      _
    $region11: #{tpu_custom_call.1} parent=1 // pred_check_branch
      %20 = sbr.rel (0) target = $region13
    $region12: #{tpu_custom_call.1} parent=1 // pred_region
      _
    $region13: #{tpu_custom_call.1} parent=1 // pred_fallthru
      _
    // Predicated region
    $region14: #{tpu_custom_call.1} parent=1 // pred_check
      _
    $region15: #{tpu_custom_call.1} parent=1 // pred_check_branch
      %22 = sbr.rel (0) target = $region17
    $region16: #{tpu_custom_call.1} parent=1 // pred_region
      %s24 = ssub.s32 128, 128
      %25 = vsyncadd [#allocation6], %s24
      %s27 = sshll.u32 [#allocation5], 4
      %s28 = int_to_ptr.vmem [resolvable:$true] %s27
      %30 = dma.hbm_to_vmem [thread:$0]  %s3, 128, %s28, [#allocation6]
    $region17: #{tpu_custom_call.1} parent=1 // pred_fallthru
      _
    // Predicated region
    $region18: #{tpu_custom_call.1} parent=1 // pred_check
      _
    $region19: #{tpu_custom_call.1} parent=1 // pred_check_branch
      %32 = sbr.rel (0) target = $region21
    $region20: #{tpu_custom_call.1} parent=1 // pred_region
      _
    $region21: #{tpu_custom_call.1} parent=1 // pred_fallthru
      _
    // Predicated region
    $region22: #{tpu_custom_call.1} parent=1 // pred_check
      _
    $region23: #{tpu_custom_call.1} parent=1 // pred_check_branch
      %34 = sbr.rel (0) target = $region25
    $region24: #{tpu_custom_call.1} parent=1 // pred_region
      %s36 = ssub.s32 128, 128
      %37 = vsyncadd [#allocation9], %s36
      %s39 = sshll.u32 [#allocation8], 4
      %s40 = int_to_ptr.vmem [resolvable:$true] %s39
      %42 = dma.hbm_to_vmem [thread:$0]  %s5, 128, %s40, [#allocation9]
    $region25: #{tpu_custom_call.1} parent=1 // pred_fallthru
      _
    // Predicated region
    $region26: #{tpu_custom_call.1} parent=1 // pred_check
      _
    $region27: #{tpu_custom_call.1} parent=1 // pred_check_branch
      %44 = sbr.rel (0) target = $region29
    $region28: #{tpu_custom_call.1} parent=1 // pred_region
      %45 = dma.done [#allocation6], 128
    $region29: #{tpu_custom_call.1} parent=1 // pred_fallthru
      _
    // Predicated region
    $region30: #{tpu_custom_call.1} parent=1 // pred_check
      _
    $region31: #{tpu_custom_call.1} parent=1 // pred_check_branch
      %47 = sbr.rel (0) target = $region33
    $region32: #{tpu_custom_call.1} parent=1 // pred_region
      %48 = dma.done [#allocation9], 128
    $region33: #{tpu_custom_call.1} parent=1 // pred_fallthru
      _
    %p49 = scmp.eq.s32.totalorder 0, 0
    // Predicated region
    $region34: #{tpu_custom_call.1} parent=1 // pred_check
      %p50 = pneg %p49
    $region35: #{tpu_custom_call.1} parent=1 // pred_check_branch
      %52 = sbr.rel (%p50) target = $region37
    $region36: #{tpu_custom_call.1} parent=1 // pred_region
      %vm53 = vcmask 0
      %54 = vst.msk [vmem:[#allocation2] sm:$0x1] %vm53, 0.0
      %55 = vst.msk [vmem:[#allocation3] sm:$0x1] %vm53, 0.0
    $region37: #{tpu_custom_call.1} parent=1 // pred_fallthru
      _
    %v56 = vld [vmem:[#allocation5] sm:$0xff]
    %v57 = vld [vmem:[#allocation8] sm:$0xff]
    %v58 = vmul.f32 %v56, %v57
    %vm59 = vcmask 261120
    %v60 = vsel %vm59, %v58, 0.0
    %61 = vadd.xlane.f32.xlu0 %v60
    %v62 = vpop.xlane.xlu0 %61
    %v63 = vmul.f32 %v56, %v56
    %v64 = vsel %vm59, %v63, 0.0
    %65 = vadd.xlane.f32.xlu0 %v64
    %v66 = vpop.xlane.xlu0 %65
    %v67 = vmul.f32 %v57, %v57
    %v68 = vsel %vm59, %v67, 0.0
    %69 = vadd.xlane.f32.xlu0 %v68
    %v70 = vpop.xlane.xlu0 %69
    %v71 = vmul.f32 %v66, %v70
    %v72 = vmax.f32 %v71, 1e-16
    %v73 = vrsqrt.pop %v72
    %v74 = vmul.f32 %v62, %v73
    %v75 = vld [vmem:[%s1] sm:$0xff]
    %v76 = vld [vmem:[%s2] sm:$0xff]
    %v77 = vld [vmem:[%s4] sm:$0xff]
    %v78 = vlaneseq
    %v79 = vand.u32 %v78, 127
    %80 = vset.pattern.permute.xlu0 0
    %81 = vperm.xlu0 %80, %v75
    %v82 = vpop.permute.xlu0 %81
    %vm83 = vcmp.eq.s32.totalorder %v79, %v82
    %v84 = vsel %vm83, 1, 0
    %v85 = vcvt.s32.f32 %v84
    %vm86 = vcmask 130048
    %v87 = vsel %vm86, %v76, -inf
    %88 = vmax.xlane.f32.xlu0 %v87
    %v89 = vpop.xlane.xlu0 %88
    %v90 = vsub.f32 %v76, %v89
    %v91 = vmul.f32 %v90, 1.442695
    %v92 = vpow.pop %v91
    %v93 = vsel %vm86, %v92, 0.0
    %94 = vadd.xlane.f32.xlu0 %v93
    %v95 = vpop.xlane.xlu0 %94
    %v96 = vlog2.pop %v95
    %v97 = vmul.f32 %v96, 0.6931472
    %v98 = vmul.f32 %v85, %v90
    %v99 = vsel %vm86, %v98, 0.0
    %100 = vadd.xlane.f32.xlu0 %v99
    %v101 = vpop.xlane.xlu0 %100
    %v102 = vsub.f32 %v97, %v101
    %v103 = vsel %vm86, %v77, -inf
    %104 = vmax.xlane.f32.xlu0 %v103
    %v105 = vpop.xlane.xlu0 %104
    %v106 = vsub.f32 %v77, %v105
    %v107 = vmul.f32 %v106, 1.442695
    %v108 = vpow.pop %v107
    %v109 = vsel %vm86, %v108, 0.0
    %110 = vadd.xlane.f32.xlu0 %v109
    %v111 = vpop.xlane.xlu0 %110
    %v112 = vlog2.pop %v111
    %v113 = vmul.f32 %v112, 0.6931472
    %v114 = vmul.f32 %v85, %v106
    %v115 = vsel %vm86, %v114, 0.0
    %116 = vadd.xlane.f32.xlu0 %v115
    %v117 = vpop.xlane.xlu0 %116
    %v118 = vsub.f32 %v113, %v117
    %v119 = vadd.f32 %v102, %v118
    %v120 = vld [vmem:[#allocation2] sm:$0x1]
    %vm121 = vcmask 7168
    %v122 = vsel %vm121, %v74, 0.0
    %123 = vadd.xlane.f32.xlu0 %v122
    %v124 = vpop.xlane.xlu0 %123
    %v125 = vrot.slane %v124, 4
    %v126 = vadd.f32 %v124, %v125
    %v127 = vrot.slane %v126, 2
    %v128 = vadd.f32 %v126, %v127
    %v129 = vrot.slane %v128, 1
    %v130 = vadd.f32 %v128, %v129
    %s131 = vtos %v130
    %v132 = vstv %s131
    %v133 = vadd.f32 %v120, %v132
    %vm134 = vcmask 0
    %135 = vst.msk [vmem:[#allocation2] sm:$0x1] %vm134, %v133
    %v136 = vld [vmem:[#allocation3] sm:$0x1]
    %v137 = vsel %vm121, %v119, 0.0
    %138 = vadd.xlane.f32.xlu0 %v137
    %v139 = vpop.xlane.xlu0 %138
    %v140 = vrot.slane %v139, 4
    %v141 = vadd.f32 %v139, %v140
    %v142 = vrot.slane %v141, 2
    %v143 = vadd.f32 %v141, %v142
    %v144 = vrot.slane %v143, 1
    %v145 = vadd.f32 %v143, %v144
    %s146 = vtos %v145
    %v147 = vstv %s146
    %v148 = vadd.f32 %v136, %v147
    %149 = vst.msk [vmem:[#allocation3] sm:$0x1] %vm134, %v148
    // Predicated region
    $region38: #{tpu_custom_call.1} parent=1 // pred_check
      %p150 = pneg %p49
    $region39: #{tpu_custom_call.1} parent=1 // pred_check_branch
      %152 = sbr.rel (%p150) target = $region41
    $region40: #{tpu_custom_call.1} parent=1 // pred_region
      %s153 = sld [smem:[#allocation4]]
      %v154 = vld [vmem:[#allocation2] sm:$0x1]
      %v155 = vmul.f32 %v154, 0.125
      %v156 = vsub.f32 1.0, %v155
      %v157 = vld [vmem:[#allocation3] sm:$0x1]
      %v158 = vmul.f32 %v157, 0.125
      %v159 = vstv %s153
      %v160 = vmul.f32 %v159, %v156
      %s161 = ssub.f32 1.0, %s153
      %v162 = vstv %s161
      %v163 = vmul.f32 %v162, %v158
      %v164 = vadd.f32 %v160, %v163
      %165 = vst.msk [vmem:[#allocation10] sm:$0x1] %vm134, %v164
    $region41: #{tpu_custom_call.1} parent=1 // pred_fallthru
      _
    // Predicated region
    $region42: #{tpu_custom_call.1} parent=1 // pred_check
      _
    $region43: #{tpu_custom_call.1} parent=1 // pred_check_branch
      %167 = sbr.rel (0) target = $region45
    $region44: #{tpu_custom_call.1} parent=1 // pred_region
      %s169 = ssub.s32 16, 16
      %170 = vsyncadd [#allocation7], %s169
      %s172 = sshll.u32 [#allocation10], 4
      %s173 = int_to_ptr.vmem [resolvable:$true] %s172
      %175 = dma.vmem_to_hbm [thread:$0]  %s173, 16, %s6, [#allocation7]
    $region45: #{tpu_custom_call.1} parent=1 // pred_fallthru
      _
    // Predicated region
    $region46: #{tpu_custom_call.1} parent=1 // pred_check
      _
    $region47: #{tpu_custom_call.1} parent=1 // pred_check_branch
      %177 = sbr.rel (0) target = $region49
    $region48: #{tpu_custom_call.1} parent=1 // pred_region
      %178 = dma.done [#allocation7], 16
    $region49: #{tpu_custom_call.1} parent=1 // pred_fallthru
      _
    %179 = vsyncpa [#allocation6], 1
    %180 = vsyncpa [#allocation9], 1
    %181 = vsyncpa [#allocation7], 1

</llo_original>
